<compile_context>
chip_gen: v5e
topology: v5e:2x2
jax: 0.10.0
libtpu: 0.0.40
codegen_flags: <defaults>
</compile_context>

<pallas_src>
import jax
import jax.numpy as jnp
from jax.experimental import pallas as pl
from jax.experimental.pallas import tpu as pltpu


def _encoder_kernel(x_ref, w1_ref, b1_ref, w2_ref, b2_ref, o_ref):
    """One batch tile: y = relu(x @ W1 + b1) @ W2 + b2.

    Block-diagonal packed weights (bf16) are VMEM-resident across the grid.
    MXU operands are bf16 (single-pass products), accumulation is f32; the
    bias-add and ReLU run on the VPU in f32.
    """
    x = x_ref[...].astype(jnp.bfloat16)                       # 1-pass MXU operands
    h = jnp.dot(x, w1_ref[...], preferred_element_type=jnp.float32)
    h = jnp.maximum(h + b1_ref[...], 0.0)                     # bias + ReLU (VPU, f32)
    # NOTE(v5e): K = pack*input_dim (256 here) spans two 128-wide K-tiles of
    # v5e's MXU (2x the pushes of v6e/v7x).  At bf16/1-pass this is still
    # re-hidden under v5e's slower HBM; if a bundle dump ever shows it
    # vmatmul-bound, split this first dot into 128-wide K chunks.
    y = jnp.dot(h.astype(jnp.bfloat16), w2_ref[...],
                preferred_element_type=jnp.float32)
    o_ref[...] = (y + b2_ref[...]).astype(o_ref.dtype)


def _round_up(x, m):
    return -(-x // m) * m


def _choose_block_rows(total_rows, target_rows, *, min_rows=2048):
    """Packed-row block size: a multiple of 8 (f32 sublane tiling) or the full
    extent.  Prefers >= 4 grid steps (>= 2 per TensorCore under v7x megacore
    sharding, so pipelining survives) but never shrinks a step below
    ~min_rows packed rows (~3 MiB of DMA) so the ~0.35us fixed per-step
    overhead stays negligible."""
    if total_rows <= 8:
        return max(total_rows, 1)
    blk = min(target_rows, total_rows)
    cap = _round_up(-(-total_rows // 4), 8)          # tile giving >= 4 grid steps
    if cap >= min_rows:
        blk = min(blk, cap)
    blk = max(8, (blk // 8) * 8)
    return min(blk, total_rows)


def pack_encoder_params(w1, b1, w2, b2, *, pack=8, mxu_dtype=jnp.bfloat16):
    """Build the lane-dense block-diagonal weights ONCE (hoisted out of the
    forward path).  `pack` batch rows are folded into the lane dimension, so
    weights are expanded block-diagonally (exact same math per row).  With
    output_dim=16 and pack=8 the output tile is 128 lanes -> dense vst."""
    input_dim, hidden = w1.shape
    output_dim = w2.shape[1]
    eye = jnp.eye(pack, dtype=w1.dtype)
    return {
        "pack": pack,
        "input_dim": input_dim,
        "hidden": hidden,
        "output_dim": output_dim,
        "w1p": jnp.kron(eye, w1).astype(mxu_dtype),   # [pack*in,  pack*hidden]
        "b1p": jnp.tile(b1, (1, pack)).astype(jnp.float32),
        "w2p": jnp.kron(eye, w2).astype(mxu_dtype),   # [pack*hid, pack*out]
        "b2p": jnp.tile(b2, (1, pack)).astype(jnp.float32),
    }


def encoder_forward(x, params, *, tile_rows=32768):
    """x: [B, input_dim] -> [B, output_dim] using the packed params from
    pack_encoder_params()."""
    pack = params["pack"]
    input_dim = params["input_dim"]
    hidden = params["hidden"]
    output_dim = params["output_dim"]
    w1p, b1p, w2p, b2p = params["w1p"], params["b1p"], params["w2p"], params["b2p"]

    B = x.shape[0]
    dtype = x.dtype

    # Keep the lane-dense layout for ANY batch: pad to a multiple of `pack`
    # with zero rows and slice the result (never fall back to masked stores).
    B_pad = _round_up(B, pack)
    if B_pad != B:
        x = jnp.pad(x, ((0, B_pad - B), (0, 0)))
    Bp = B_pad // pack
    xp = x.reshape(Bp, pack * input_dim)              # free row-major reshape

    tbp = _choose_block_rows(Bp, max(8, tile_rows // pack))
    grid = (pl.cdiv(Bp, tbp),)

    out_p = pl.pallas_call(
        _encoder_kernel,
        out_shape=jax.ShapeDtypeStruct((Bp, pack * output_dim), dtype),
        grid_spec=pltpu.PrefetchScalarGridSpec(
            num_scalar_prefetch=0,
            grid=grid,
            in_specs=[
                # x tile.  If a trace ever shows exposed DMA, sweep
                # pipeline_mode=pl.Buffered(3) on this spec.
                pl.BlockSpec((tbp, pack * input_dim), lambda i: (i, 0)),
                # Weights / biases: VMEM-resident across the whole grid.
                pl.BlockSpec((pack * input_dim, pack * hidden), lambda i: (0, 0)),
                pl.BlockSpec((1, pack * hidden), lambda i: (0, 0)),
                pl.BlockSpec((pack * hidden, pack * output_dim), lambda i: (0, 0)),
                pl.BlockSpec((1, pack * output_dim), lambda i: (0, 0)),
            ],
            out_specs=pl.BlockSpec((tbp, pack * output_dim), lambda i: (i, 0)),
        ),
        compiler_params=pltpu.CompilerParams(
            # Batch axis is independent -> shards across the 2 TCs on v7x.
            dimension_semantics=("parallel",),
            # Largest tile is ~4 MiB x + ~2 MiB out, double-buffered, plus
            # tiny weights: well under 48 MiB, which is safe on v5e/v6e/v7x.
            vmem_limit_bytes=48 * 1024 * 1024,
        ),
    )(xp, w1p, b1p, w2p, b2p)

    y = out_p.reshape(B_pad, output_dim)
    if B_pad != B:
        y = y[:B]
    return y


def init_params(key, input_dim, output_dim, hidden=10, dtype=jnp.float32):
    """Deterministic init matching torch.nn.Linear's U(-1/sqrt(fan_in), 1/sqrt(fan_in))."""
    k1, k2, k3, k4 = jax.random.split(key, 4)
    bound1 = 1.0 / jnp.sqrt(input_dim)
    bound2 = 1.0 / jnp.sqrt(hidden)
    # Stored as [in, out] (transposed relative to torch's [out, in]).
    w1 = jax.random.uniform(k1, (input_dim, hidden), dtype, -bound1, bound1)
    b1 = jax.random.uniform(k2, (1, hidden), dtype, -bound1, bound1)
    w2 = jax.random.uniform(k3, (hidden, output_dim), dtype, -bound2, bound2)
    b2 = jax.random.uniform(k4, (1, output_dim), dtype, -bound2, bound2)
    return w1, b1, w2, b2


def _reference(x, w1, b1, w2, b2, *, mxu_dtype=jnp.bfloat16):
    """Pure-JAX reference with the same operand rounding as the kernel
    (bf16 MXU operands, f32 accumulation, f32 bias/ReLU)."""
    h = jnp.dot(x.astype(mxu_dtype), w1.astype(mxu_dtype),
                preferred_element_type=jnp.float32)
    h = jnp.maximum(h + b1, 0.0)
    y = jnp.dot(h.astype(mxu_dtype), w2.astype(mxu_dtype),
                preferred_element_type=jnp.float32)
    return y + b2


if __name__ == "__main__":
    key = jax.random.PRNGKey(0)
    kx, kp, kx2 = jax.random.split(key, 3)

    batch, input_dim, output_dim = 64, 32, 16
    x = jax.random.normal(kx, (batch, input_dim), jnp.float32)
    w1, b1, w2, b2 = init_params(kp, input_dim, output_dim)

    # Pack the block-diagonal weights ONCE (hoisted out of the forward path).
    params = pack_encoder_params(w1, b1, w2, b2)

    y = encoder_forward(x, params)
    y = jax.block_until_ready(y)
    assert y.shape == (batch, output_dim)

    # Reference 1: identical op sequence in pure JAX (bf16 operands, f32 acc).
    y_ref = _reference(x, w1, b1, w2, b2)
    assert jnp.allclose(y, y_ref, atol=5e-3, rtol=5e-3)

    # Reference 2: full-f32 math (the literal PyTorch module); difference is
    # only the bf16 rounding of the MXU operands -> loose tolerance.
    y_ref_f32 = jnp.maximum(x @ w1 + b1, 0.0) @ w2 + b2
    assert jnp.allclose(y, y_ref_f32, atol=1e-1, rtol=1e-1)

    # Exercise the pad-to-multiple-of-8 path (batch not divisible by 8).
    x2 = jax.random.normal(kx2, (13, input_dim), jnp.float32)
    y2 = jax.block_until_ready(encoder_forward(x2, params))
    assert y2.shape == (13, output_dim)
    assert jnp.allclose(y2, _reference(x2, w1, b1, w2, b2), atol=5e-3, rtol=5e-3)

    print("KERNEL_OK")
</pallas_src>

<mosaic_0001>
module attributes {stable_mosaic.version = 11 : i64} {
  func.func @_encoder_kernel(%arg0: i32, %arg1: memref<8x256xf32, #tpu.memory_space<vmem>>, %arg2: memref<256x80xbf16, #tpu.memory_space<vmem>>, %arg3: memref<1x80xf32, #tpu.memory_space<vmem>>, %arg4: memref<80x128xbf16, #tpu.memory_space<vmem>>, %arg5: memref<1x128xf32, #tpu.memory_space<vmem>>, %arg6: memref<8x128xf32, #tpu.memory_space<vmem>>) attributes {dimension_semantics = [#tpu.dimension_semantics<parallel>], iteration_bounds = array<i64: 1>, scalar_prefetch = 0 : i64, scratch_operands = 0 : i64, tpu.core_type = #tpu.core_type<tc>, window_params = [{transform_indices = @transform_0, window_bounds = array<i64: 8, 256>}, {pipeline_mode = #tpu.pipeline_mode<synchronous>, transform_indices = @transform_1, window_bounds = array<i64: 256, 80>}, {pipeline_mode = #tpu.pipeline_mode<synchronous>, transform_indices = @transform_2, window_bounds = array<i64: 1, 80>}, {pipeline_mode = #tpu.pipeline_mode<synchronous>, transform_indices = @transform_3, window_bounds = array<i64: 80, 128>}, {pipeline_mode = #tpu.pipeline_mode<synchronous>, transform_indices = @transform_4, window_bounds = array<i64: 1, 128>}, {transform_indices = @transform_5, window_bounds = array<i64: 8, 128>}]} {
    %c0 = arith.constant 0 : index
    %c0_0 = arith.constant 0 : index
    %0 = vector.load %arg1[%c0, %c0_0] : memref<8x256xf32, #tpu.memory_space<vmem>>, vector<8x256xf32>
    %1 = arith.truncf %0 : vector<8x256xf32> to vector<8x256xbf16>
    %c0_1 = arith.constant 0 : index
    %c0_2 = arith.constant 0 : index
    %2 = vector.load %arg2[%c0_1, %c0_2] : memref<256x80xbf16, #tpu.memory_space<vmem>>, vector<256x80xbf16>
    %cst = arith.constant dense<0.000000e+00> : vector<8x80xf32>
    %3 = tpu.matmul %1, %2, %cst {dimension_numbers = #tpu.dot_dimension_numbers<[1], [0], [0], [1], [0, 0, 1, 1], [], []>} : vector<8x256xbf16>, vector<256x80xbf16>, vector<8x80xf32> -> vector<8x80xf32>
    %c0_3 = arith.constant 0 : index
    %c0_4 = arith.constant 0 : index
    %4 = vector.load %arg3[%c0_3, %c0_4] : memref<1x80xf32, #tpu.memory_space<vmem>>, vector<1x80xf32>
    %5 = vector.broadcast %4 : vector<1x80xf32> to vector<8x80xf32>
    %6 = arith.addf %3, %5 : vector<8x80xf32>
    %cst_5 = arith.constant 0.000000e+00 : f32
    %7 = vector.broadcast %cst_5 : f32 to vector<8x80xf32>
    %8 = arith.maximumf %6, %7 : vector<8x80xf32>
    %9 = arith.truncf %8 : vector<8x80xf32> to vector<8x80xbf16>
    %c0_6 = arith.constant 0 : index
    %c0_7 = arith.constant 0 : index
    %10 = vector.load %arg4[%c0_6, %c0_7] : memref<80x128xbf16, #tpu.memory_space<vmem>>, vector<80x128xbf16>
    %cst_8 = arith.constant dense<0.000000e+00> : vector<8x128xf32>
    %11 = tpu.matmul %9, %10, %cst_8 {dimension_numbers = #tpu.dot_dimension_numbers<[1], [0], [0], [1], [0, 0, 1, 1], [], []>} : vector<8x80xbf16>, vector<80x128xbf16>, vector<8x128xf32> -> vector<8x128xf32>
    %c0_9 = arith.constant 0 : index
    %c0_10 = arith.constant 0 : index
    %12 = vector.load %arg5[%c0_9, %c0_10] : memref<1x128xf32, #tpu.memory_space<vmem>>, vector<1x128xf32>
    %13 = vector.broadcast %12 : vector<1x128xf32> to vector<8x128xf32>
    %14 = arith.addf %11, %13 : vector<8x128xf32>
    %c0_11 = arith.constant 0 : index
    %c0_12 = arith.constant 0 : index
    %15 = vector.load %arg6[%c0_11, %c0_12] : memref<8x128xf32, #tpu.memory_space<vmem>>, vector<8x128xf32>
    tpu.vector_store %arg6[%c0_11, %c0_12], %14 {strides = array<i32>} : memref<8x128xf32, #tpu.memory_space<vmem>>, vector<8x128xf32>,
    return
  }
  func.func @transform_0(%arg0: i32) -> (i32, i32) {
    %c0_i32 = arith.constant 0 : i32
    %c0_i32_0 = arith.constant 0 : i32
    return %arg0, %c0_i32 : i32, i32
  }
  func.func @transform_1(%arg0: i32) -> (i32, i32) {
    %c0_i32 = arith.constant 0 : i32
    %c0_i32_0 = arith.constant 0 : i32
    %c0_i32_1 = arith.constant 0 : i32
    return %c0_i32, %c0_i32_0 : i32, i32
  }
  func.func @transform_2(%arg0: i32) -> (i32, i32) {
    %c0_i32 = arith.constant 0 : i32
    %c0_i32_0 = arith.constant 0 : i32
    %c0_i32_1 = arith.constant 0 : i32
    return %c0_i32, %c0_i32_0 : i32, i32
  }
  func.func @transform_3(%arg0: i32) -> (i32, i32) {
    %c0_i32 = arith.constant 0 : i32
    %c0_i32_0 = arith.constant 0 : i32
    %c0_i32_1 = arith.constant 0 : i32
    return %c0_i32, %c0_i32_0 : i32, i32
  }
  func.func @transform_4(%arg0: i32) -> (i32, i32) {
    %c0_i32 = arith.constant 0 : i32
    %c0_i32_0 = arith.constant 0 : i32
    %c0_i32_1 = arith.constant 0 : i32
    return %c0_i32, %c0_i32_0 : i32, i32
  }
  func.func @transform_5(%arg0: i32) -> (i32, i32) {
    %c0_i32 = arith.constant 0 : i32
    %c0_i32_0 = arith.constant 0 : i32
    return %arg0, %c0_i32 : i32, i32
  }
}

</mosaic_0001>

<llo_original>
// kernel: tpu_custom_call.1
$region0: #{tpu_custom_call.1}
  #allocation0 [shape = 'u32[]', space=smem, size = 0x4, offset = 0x4, fixed_abs, tag = 'smem constant byte address 0x4 - core index']
  #allocation1 [shape = 'u32[72,128]{1,0:T(1,128)}', space=vmem, size = 0x9000, scoped, tag = 'internal scratch']
  %s0 = inlined_call_operand.vmem [shape: f32[8,256], index: 0, kind: input, shape index: {}]
  %s1 = inlined_call_operand.vmem [shape: bf16[256,80], index: 1, kind: input, shape index: {}]
  %s2 = inlined_call_operand.vmem [shape: f32[1,80], index: 2, kind: input, shape index: {}]
  %s3 = inlined_call_operand.vmem [shape: bf16[80,128], index: 3, kind: input, shape index: {}]
  %s4 = inlined_call_operand.vmem [shape: f32[1,128], index: 4, kind: input, shape index: {}]
  %s5 = inlined_call_operand.hbm [shape: f32[8,128], index: 5, kind: output, shape index: {}]
  %s6 = sld [smem:[#allocation0]]
  $region30: #{tpu_custom_call.1} parent=0
    _
  %s8 = ssub.s32 1, %s6
  %s9 = scalar_select 0, %s8, %s6
  $region1: #{tpu_custom_call.1} parent=0
    #allocation2 [shape = 'u8[4096]{0}', space=vmem, size = 0x1000, scoped, tag = 'output window, operand 0, single buffered']
    #allocation3 [shape = 's32[1]{0}', space=sflag, size = 0x4, scoped, tag = 'scoped memory for tpu_custom_call.1']
    %10 = vsyncpa [#allocation3], 0
    // Predicated region
    $region2: #{tpu_custom_call.1} parent=1 // pred_check
      _
    $region3: #{tpu_custom_call.1} parent=1 // pred_check_branch
      %12 = sbr.rel (0) target = $region5
    $region4: #{tpu_custom_call.1} parent=1 // pred_region
      _
    $region5: #{tpu_custom_call.1} parent=1 // pred_fallthru
      _
    // Predicated region
    $region6: #{tpu_custom_call.1} parent=1 // pred_check
      _
    $region7: #{tpu_custom_call.1} parent=1 // pred_check_branch
      %14 = sbr.rel (0) target = $region9
    $region8: #{tpu_custom_call.1} parent=1 // pred_region
      _
    $region9: #{tpu_custom_call.1} parent=1 // pred_fallthru
      _
    // Predicated region
    $region10: #{tpu_custom_call.1} parent=1 // pred_check
      _
    $region11: #{tpu_custom_call.1} parent=1 // pred_check_branch
      %16 = sbr.rel (0) target = $region13
    $region12: #{tpu_custom_call.1} parent=1 // pred_region
      _
    $region13: #{tpu_custom_call.1} parent=1 // pred_fallthru
      _
    // Predicated region
    $region14: #{tpu_custom_call.1} parent=1 // pred_check
      _
    $region15: #{tpu_custom_call.1} parent=1 // pred_check_branch
      %18 = sbr.rel (0) target = $region17
    $region16: #{tpu_custom_call.1} parent=1 // pred_region
      _
    $region17: #{tpu_custom_call.1} parent=1 // pred_fallthru
      _
    // Predicated region
    $region18: #{tpu_custom_call.1} parent=1 // pred_check
      _
    $region19: #{tpu_custom_call.1} parent=1 // pred_check_branch
      %20 = sbr.rel (0) target = $region21
    $region20: #{tpu_custom_call.1} parent=1 // pred_region
      _
    $region21: #{tpu_custom_call.1} parent=1 // pred_fallthru
      _
    %v22 = vld [vmem:[%s0] sm:$0xff]
    %v23 = vld [vmem:[%s0 + $0x8] sm:$0xff]
    %v24 = vpack.c.bf16 %v22, %v22
    %v25 = vpack.c.bf16 %v23, %v23
    %v26 = vld [vmem:[%s1] sm:$0xf]
    %v27 = vld [vmem:[%s1 + $0x4] sm:$0xf]
    %v28 = vld [vmem:[%s1 + $0x8] sm:$0xf]
    %v29 = vld [vmem:[%s1 + $0xc] sm:$0xf]
    %v30 = vld [vmem:[%s1 + $0x10] sm:$0xf]
    %v31 = vld [vmem:[%s1 + $0x14] sm:$0xf]
    %v32 = vld [vmem:[%s1 + $0x18] sm:$0xf]
    %v33 = vld [vmem:[%s1 + $0x1c] sm:$0xf]
    %v34 = vld [vmem:[%s1 + $0x20] sm:$0xf]
    %v35 = vld [vmem:[%s1 + $0x24] sm:$0xf]
    %v36 = vld [vmem:[%s1 + $0x28] sm:$0xf]
    %v37 = vld [vmem:[%s1 + $0x2c] sm:$0xf]
    %v38 = vld [vmem:[%s1 + $0x30] sm:$0xf]
    %v39 = vld [vmem:[%s1 + $0x34] sm:$0xf]
    %v40 = vld [vmem:[%s1 + $0x38] sm:$0xf]
    %v41 = vld [vmem:[%s1 + $0x3c] sm:$0xf]
    %v42 = vld [vmem:[%s1 + $0x40] sm:$0xf]
    %v43 = vld [vmem:[%s1 + $0x44] sm:$0xf]
    %v44 = vld [vmem:[%s1 + $0x48] sm:$0xf]
    %v45 = vld [vmem:[%s1 + $0x4c] sm:$0xf]
    %v46 = vld [vmem:[%s1 + $0x50] sm:$0xf]
    %v47 = vld [vmem:[%s1 + $0x54] sm:$0xf]
    %v48 = vld [vmem:[%s1 + $0x58] sm:$0xf]
    %v49 = vld [vmem:[%s1 + $0x5c] sm:$0xf]
    %v50 = vld [vmem:[%s1 + $0x60] sm:$0xf]
    %v51 = vld [vmem:[%s1 + $0x64] sm:$0xf]
    %v52 = vld [vmem:[%s1 + $0x68] sm:$0xf]
    %v53 = vld [vmem:[%s1 + $0x6c] sm:$0xf]
    %v54 = vld [vmem:[%s1 + $0x70] sm:$0xf]
    %v55 = vld [vmem:[%s1 + $0x74] sm:$0xf]
    %v56 = vld [vmem:[%s1 + $0x78] sm:$0xf]
    %v57 = vld [vmem:[%s1 + $0x7c] sm:$0xf]
    %v58 = vld [vmem:[%s2] sm:$0x1]
    %v60 = vperm.slane %v58, 0
    %v94 = vunpack.c.l.b16 %v26
    %v95 = vunpack.c.l.b16 %v27
    %v96 = vunpack.c.l.b16 %v28
    %v97 = vunpack.c.l.b16 %v29
    %v98 = vunpack.c.l.b16 %v30
    %v99 = vunpack.c.l.b16 %v31
    %v100 = vunpack.c.l.b16 %v32
    %v101 = vunpack.c.l.b16 %v33
    %v102 = vunpack.c.l.b16 %v34
    %v103 = vunpack.c.l.b16 %v35
    %v104 = vunpack.c.l.b16 %v36
    %v105 = vunpack.c.l.b16 %v37
    %v106 = vunpack.c.l.b16 %v38
    %v107 = vunpack.c.l.b16 %v39
    %v108 = vunpack.c.l.b16 %v40
    %v109 = vunpack.c.l.b16 %v41
    %v110 = vunpack.c.l.b16 %v42
    %v111 = vunpack.c.l.b16 %v43
    %v112 = vunpack.c.l.b16 %v44
    %v113 = vunpack.c.l.b16 %v45
    %v114 = vunpack.c.l.b16 %v46
    %v115 = vunpack.c.l.b16 %v47
    %v116 = vunpack.c.l.b16 %v48
    %v117 = vunpack.c.l.b16 %v49
    %v118 = vunpack.c.l.b16 %v50
    %v119 = vunpack.c.l.b16 %v51
    %v120 = vunpack.c.l.b16 %v52
    %v121 = vunpack.c.l.b16 %v53
    %v122 = vunpack.c.l.b16 %v54
    %v123 = vunpack.c.l.b16 %v55
    %v124 = vunpack.c.l.b16 %v56
    %v125 = vunpack.c.l.b16 %v57
    %v126 = vpack.c.b16 %v95, %v94
    %v127 = vpack.c.b16 %v97, %v96
    %v128 = vpack.c.b16 %v99, %v98
    %v129 = vpack.c.b16 %v101, %v100
    %v130 = vpack.c.b16 %v103, %v102
    %v131 = vpack.c.b16 %v105, %v104
    %v132 = vpack.c.b16 %v107, %v106
    %v133 = vpack.c.b16 %v109, %v108
    %v134 = vpack.c.b16 %v111, %v110
    %v135 = vpack.c.b16 %v113, %v112
    %v136 = vpack.c.b16 %v115, %v114
    %v137 = vpack.c.b16 %v117, %v116
    %v138 = vpack.c.b16 %v119, %v118
    %v139 = vpack.c.b16 %v121, %v120
    %v140 = vpack.c.b16 %v123, %v122
    %v141 = vpack.c.b16 %v125, %v124
    %158 = vmatpush.bf16.msra.mxu0 %v133
    %159 = vmatpush.bf16.msra.mxu0 %v132
    %160 = vmatpush.bf16.msra.mxu0 %v131
    %161 = vmatpush.bf16.msra.mxu0 %v130
    %162 = vmatpush.bf16.msra.mxu0 %v129
    %163 = vmatpush.bf16.msra.mxu0 %v128
    %164 = vmatpush.bf16.msra.mxu0 %v127
    %165 = vmatpush.bf16.msra.mxu0 %v126
    %166 = vmatmul.bf16.gmra.mxu0 %v24
    %v167 = vpop.f32.mrf.mxu0
    %v168 = vadd.f32 %v60, %v167
    %v169 = vpop.f32.mrf.mxu0
    %170 = vdwg.mxu0
    %171 = vmatpush.bf16.msra.mxu0 %v141
    %172 = vmatpush.bf16.msra.mxu0 %v140
    %173 = vmatpush.bf16.msra.mxu0 %v139
    %174 = vmatpush.bf16.msra.mxu0 %v138
    %175 = vmatpush.bf16.msra.mxu0 %v137
    %176 = vmatpush.bf16.msra.mxu0 %v136
    %177 = vmatpush.bf16.msra.mxu0 %v135
    %178 = vmatpush.bf16.msra.mxu0 %v134
    %179 = vmatmul.bf16.gmra.mxu0 %v25
    %v180 = vpop.f32.mrf.mxu0
    %v181 = vadd.f32 %v168, %v180
    %v182 = vpop.f32.mrf.mxu0
    %183 = vdwg.mxu0
    %v184 = vmax.f32 %v181, 0.0
    %v185 = vpack.c.bf16 %v184, %v184
    %v186 = vld [vmem:[%s3] sm:$0xf]
    %v187 = vld [vmem:[%s3 + $0x4] sm:$0xf]
    %v188 = vld [vmem:[%s3 + $0x8] sm:$0xf]
    %v189 = vld [vmem:[%s3 + $0xc] sm:$0xf]
    %v190 = vld [vmem:[%s3 + $0x10] sm:$0xf]
    %v191 = vld [vmem:[%s3 + $0x14] sm:$0xf]
    %v192 = vld [vmem:[%s3 + $0x18] sm:$0xf]
    %v193 = vld [vmem:[%s3 + $0x1c] sm:$0xf]
    %v194 = vld [vmem:[%s3 + $0x20] sm:$0xf]
    %v195 = vld [vmem:[%s3 + $0x24] sm:$0xf]
    %v196 = vld [vmem:[%s4] sm:$0x1]
    %v198 = vperm.slane %v196, 0
    %v210 = vunpack.c.l.b16 %v186
    %v211 = vunpack.c.l.b16 %v187
    %v212 = vunpack.c.l.b16 %v188
    %v213 = vunpack.c.l.b16 %v189
    %v214 = vunpack.c.l.b16 %v190
    %v215 = vunpack.c.l.b16 %v191
    %v216 = vunpack.c.l.b16 %v192
    %v217 = vunpack.c.l.b16 %v193
    %v218 = vunpack.c.l.b16 %v194
    %v219 = vunpack.c.l.b16 %v195
    %v220 = vpack.c.b16 %v211, %v210
    %v221 = vpack.c.b16 %v213, %v212
    %v222 = vpack.c.b16 %v215, %v214
    %v223 = vpack.c.b16 %v217, %v216
    %v224 = vpack.c.b16 %v219, %v218
    %vm230 = vcmask 654336
    %v232 = vsel %vm230, %v185, 0
    %234 = vmatpush.bf16.msra.mxu0 0
    %235 = vmatpush.bf16.msra.mxu0 0
    %236 = vmatpush.bf16.msra.mxu0 0
    %237 = vmatpush.bf16.msra.mxu0 %v224
    %238 = vmatpush.bf16.msra.mxu0 %v223
    %239 = vmatpush.bf16.msra.mxu0 %v222
    %240 = vmatpush.bf16.msra.mxu0 %v221
    %241 = vmatpush.bf16.msra.mxu0 %v220
    %242 = vmatmul.bf16.gmra.mxu0 %v232
    %v243 = vpop.f32.mrf.mxu0
    %v244 = vadd.f32 %v198, %v243
    %v245 = vpop.f32.mrf.mxu0
    %246 = vdwg.mxu0
    %247 = vst [vmem:[#allocation2] sm:$0xff] %v244
    // Predicated region
    $region22: #{tpu_custom_call.1} parent=1 // pred_check
      _
    $region23: #{tpu_custom_call.1} parent=1 // pred_check_branch
      %249 = sbr.rel (0) target = $region25
    $region24: #{tpu_custom_call.1} parent=1 // pred_region
      %251 = vsyncadd [#allocation3], 0
      %s253 = sshll.u32 [#allocation2], 4
      %s254 = int_to_ptr.vmem [resolvable:$true] %s253
      %s255 = sshll.u32 %s5, 4
      %s256 = int_to_ptr.hbm [resolvable:$true] %s255
      %258 = dma.vmem_to_hbm [thread:$0]  %s254, 128, %s256, [#allocation3]
    $region25: #{tpu_custom_call.1} parent=1 // pred_fallthru
      _
    // Predicated region
    $region26: #{tpu_custom_call.1} parent=1 // pred_check
      _
    $region27: #{tpu_custom_call.1} parent=1 // pred_check_branch
      %260 = sbr.rel (0) target = $region29
    $region28: #{tpu_custom_call.1} parent=1 // pred_region
      %262 = dma.done [#allocation3], 128
    $region29: #{tpu_custom_call.1} parent=1 // pred_fallthru
      _
    %263 = vsyncpa [#allocation3], 1

</llo_original>
